<compile_context>
chip_gen: v7x
topology: tpu7x:2x2x1
jax: 0.10.0
libtpu: 0.0.40
codegen_flags: <defaults>
</compile_context>

<pallas_src>
import math

import jax
import jax.numpy as jnp
from jax.experimental import pallas as pl
from jax.experimental.pallas import tpu as pltpu


def _round_up(x: int, m: int) -> int:
    return (x + m - 1) // m * m


def _largest_divisor(n: int, cap: int) -> int:
    """Largest divisor of n that is <= cap (>= 1)."""
    for d in range(min(n, max(cap, 1)), 0, -1):
        if n % d == 0:
            return d
    return 1


def _eventvpr_kernel(x_ref, w_ref, o_ref):
    """Grid step (i, j, k): accumulate x[i, k] @ Wt[k, j] into the resident
    output block; on the last K step apply the LIF threshold in place."""
    k = pl.program_id(2)

    @pl.when(k == 0)
    def _():
        o_ref[...] = jnp.zeros_like(o_ref)

    # x block: (bm, tk); w block (transposed weight): (tk, tn)  ->  (bm, tn)
    o_ref[...] += jnp.dot(x_ref[...], w_ref[...],
                          preferred_element_type=jnp.float32)

    @pl.when(k == pl.num_programs(2) - 1)
    def _():
        # LIF (tau=2, v_reset=0, v_threshold=1): spike = (I/2 >= 1) == (I >= 2)
        o_ref[...] = (o_ref[...] >= 2.0).astype(o_ref.dtype)


def prepare_eventvpr_weight(weight):
    """Pad + transpose the PyTorch-layout (n_out, n_in) weight ONCE at init.

    Returns an f32 array of shape (round_up(n_in,128), round_up(n_out,128))
    with zero padding (padded outputs threshold to 0 and are sliced off).
    """
    n_out, n_in = weight.shape
    n_in_p = _round_up(n_in, 128)
    n_out_p = _round_up(n_out, 128)
    w_t = weight.astype(jnp.float32).T  # (n_in, n_out), lane-dense in n_out
    if (n_in_p, n_out_p) != (n_in, n_out):
        w_t = jnp.zeros((n_in_p, n_out_p), jnp.float32).at[:n_in, :n_out].set(w_t)
    return w_t


def eventvpr_forward(x_nchw, w_prepared, n_out, *,
                     bm_max=256, tn_max=1024, tk_max=2048):
    """x_nchw: (B, C, H, W) float32; w_prepared: output of prepare_eventvpr_weight."""
    B = x_nchw.shape[0]
    n_in = math.prod(x_nchw.shape[1:])
    n_in_p, n_out_p = w_prepared.shape
    assert n_in_p == _round_up(n_in, 128), "prepared weight does not match input size"

    # --- tile plan: tiles are divisors of the 128-aligned sizes (no dead weight).
    tk = 128 * _largest_divisor(n_in_p // 128, tk_max // 128)
    out_units = n_out_p // 128
    tn_cap = tn_max // 128
    if out_units >= 2:
        # Keep >= 2 j tiles so the v7x second TensorCore has work to shard.
        tn_cap = min(tn_cap, out_units // 2)
    tn = 128 * _largest_divisor(out_units, tn_cap)

    # --- batch tiling (parallel axis); padded rows are zeros -> spike 0, sliced off.
    bm = min(_round_up(max(B, 8), 8), _round_up(bm_max, 8))
    b_pad = _round_up(max(B, 8), bm)

    x_flat = x_nchw.reshape(B, n_in).astype(jnp.float32)  # nn.Flatten()
    if (b_pad, n_in_p) != (B, n_in):
        x_p = jnp.zeros((b_pad, n_in_p), jnp.float32).at[:B, :n_in].set(x_flat)
    else:
        x_p = x_flat

    grid = (b_pad // bm, n_out_p // tn, n_in_p // tk)

    # Double-buffered footprint of the three blocks, plus some headroom; clamp
    # so it stays safe on v7x (64 MiB physical VMEM).
    vmem_bytes = 2 * 4 * (bm * tk + tk * tn + bm * tn) + (2 << 20)
    vmem_limit = int(min(max(vmem_bytes, 32 << 20), 56 << 20))

    out_padded = pl.pallas_call(
        _eventvpr_kernel,
        out_shape=jax.ShapeDtypeStruct((b_pad, n_out_p), jnp.float32),
        grid_spec=pltpu.PrefetchScalarGridSpec(
            num_scalar_prefetch=0,
            grid=grid,
            in_specs=[
                pl.BlockSpec((bm, tk), lambda i, j, k: (i, k)),   # x batch/K tile
                pl.BlockSpec((tk, tn), lambda i, j, k: (k, j)),   # W^T tile (lane-dense)
            ],
            # Output block resident across the K axis -> it is the accumulator.
            out_specs=pl.BlockSpec((bm, tn), lambda i, j, k: (i, j)),
        ),
        compiler_params=pltpu.CompilerParams(
            dimension_semantics=("parallel", "parallel", "arbitrary"),
            vmem_limit_bytes=vmem_limit,
        ),
    )(x_p, w_prepared)

    return out_padded[:B, :n_out]


def eventvpr_reference(x_nchw, weight):
    B = x_nchw.shape[0]
    n_out, n_in = weight.shape
    x_flat = x_nchw.reshape(B, n_in).astype(jnp.float32)
    v = (x_flat @ weight.T.astype(jnp.float32)) * 0.5
    return (v >= 1.0).astype(jnp.float32)


if __name__ == "__main__":
    # Small shapes consistent with the module: n_in = C*H*W, n_out = output neurons.
    B, C, H, W = 2, 4, 16, 16
    n_in = C * H * W        # 1024
    n_out = 32
    w_mean = 0.05           # self.w_mean: weights ~ Normal(mean=w_mean)

    key = jax.random.PRNGKey(0)
    kx, kw = jax.random.split(key)
    # Event-style binary input (spikes), like event-camera frames.
    x = (jax.random.uniform(kx, (B, C, H, W)) < 0.2).astype(jnp.float32)
    # Deterministic init matching nn.init.normal_(weight, mean=w_mean), shape (n_out, n_in).
    weight = w_mean + 0.1 * jax.random.normal(kw, (n_out, n_in), dtype=jnp.float32)

    # Weight is padded / transposed ONCE (parameter-init time), not per forward.
    w_prep = prepare_eventvpr_weight(weight)

    out = eventvpr_forward(x, w_prep, n_out)
    out = jax.block_until_ready(out)

    ref = eventvpr_reference(x, weight)
    assert out.shape == (B, n_out)
    assert out.dtype == jnp.float32
    if not bool(jnp.all(out == ref)):
        # Only tolerate flips where the membrane potential sits numerically at
        # threshold (f32 accumulation-order ties); anything else is a real bug.
        v = (x.reshape(B, n_in).astype(jnp.float32) @ weight.T) * 0.5
        tie = jnp.abs(v - 1.0) <= 1e-4
        assert bool(jnp.all((out == ref) | tie)), "Pallas output mismatches reference"

    print("KERNEL_OK")
</pallas_src>

<mosaic_0001>
module attributes {stable_mosaic.version = 11 : i64} {
  func.func @_eventvpr_kernel(%arg0: i32, %arg1: i32, %arg2: i32, %arg3: memref<8x1024xf32, #tpu.memory_space<vmem>>, %arg4: memref<1024x128xf32, #tpu.memory_space<vmem>>, %arg5: memref<8x128xf32, #tpu.memory_space<vmem>>) attributes {dimension_semantics = [#tpu.dimension_semantics<parallel>, #tpu.dimension_semantics<parallel>, #tpu.dimension_semantics<arbitrary>], iteration_bounds = array<i64: 1, 1, 1>, scalar_prefetch = 0 : i64, scratch_operands = 0 : i64, tpu.core_type = #tpu.core_type<tc>, window_params = [{transform_indices = @transform_0, window_bounds = array<i64: 8, 1024>}, {transform_indices = @transform_1, window_bounds = array<i64: 1024, 128>}, {transform_indices = @transform_2, window_bounds = array<i64: 8, 128>}]} {
    %c0_i32 = arith.constant 0 : i32
    %0 = arith.cmpi eq, %arg2, %c0_i32 : i32
    %1 = arith.extui %0 : i1 to i32
    %c0_i32_0 = arith.constant 0 : i32
    %2 = arith.cmpi ne, %1, %c0_i32_0 : i32
    scf.if %2 {
      %cst_10 = arith.constant 0.000000e+00 : f32
      %12 = vector.broadcast %cst_10 : f32 to vector<8x128xf32>
      %c0_11 = arith.constant 0 : index
      %c0_12 = arith.constant 0 : index
      %13 = vector.load %arg5[%c0_11, %c0_12] : memref<8x128xf32, #tpu.memory_space<vmem>>, vector<8x128xf32>
      tpu.vector_store %arg5[%c0_11, %c0_12], %12 {strides = array<i32>} : memref<8x128xf32, #tpu.memory_space<vmem>>, vector<8x128xf32>,
    } else {
    }
    %c0 = arith.constant 0 : index
    %c0_1 = arith.constant 0 : index
    %3 = vector.load %arg5[%c0, %c0_1] : memref<8x128xf32, #tpu.memory_space<vmem>>, vector<8x128xf32>
    %c0_2 = arith.constant 0 : index
    %c0_3 = arith.constant 0 : index
    %4 = vector.load %arg3[%c0_2, %c0_3] : memref<8x1024xf32, #tpu.memory_space<vmem>>, vector<8x1024xf32>
    %c0_4 = arith.constant 0 : index
    %c0_5 = arith.constant 0 : index
    %5 = vector.load %arg4[%c0_4, %c0_5] : memref<1024x128xf32, #tpu.memory_space<vmem>>, vector<1024x128xf32>
    %cst = arith.constant dense<0.000000e+00> : vector<8x128xf32>
    %6 = tpu.matmul %4, %5, %cst {dimension_numbers = #tpu.dot_dimension_numbers<[1], [0], [0], [1], [0, 0, 1, 1], [], []>} : vector<8x1024xf32>, vector<1024x128xf32>, vector<8x128xf32> -> vector<8x128xf32>
    %7 = arith.addf %3, %6 : vector<8x128xf32>
    %c0_6 = arith.constant 0 : index
    %c0_7 = arith.constant 0 : index
    %8 = vector.load %arg5[%c0_6, %c0_7] : memref<8x128xf32, #tpu.memory_space<vmem>>, vector<8x128xf32>
    tpu.vector_store %arg5[%c0_6, %c0_7], %7 {strides = array<i32>} : memref<8x128xf32, #tpu.memory_space<vmem>>, vector<8x128xf32>,
    %c0_i32_8 = arith.constant 0 : i32
    %9 = arith.cmpi eq, %arg2, %c0_i32_8 : i32
    %10 = arith.extui %9 : i1 to i32
    %c0_i32_9 = arith.constant 0 : i32
    %11 = arith.cmpi ne, %10, %c0_i32_9 : i32
    scf.if %11 {
      %c0_10 = arith.constant 0 : index
      %c0_11 = arith.constant 0 : index
      %12 = vector.load %arg5[%c0_10, %c0_11] : memref<8x128xf32, #tpu.memory_space<vmem>>, vector<8x128xf32>
      %cst_12 = arith.constant 2.000000e+00 : f32
      %13 = vector.broadcast %cst_12 : f32 to vector<8x128xf32>
      %14 = arith.cmpf oge, %12, %13 : vector<8x128xf32>
      %15 = arith.extui %14 : vector<8x128xi1> to vector<8x128xi32>
      %16 = arith.sitofp %15 : vector<8x128xi32> to vector<8x128xf32>
      %c0_13 = arith.constant 0 : index
      %c0_14 = arith.constant 0 : index
      %17 = vector.load %arg5[%c0_13, %c0_14] : memref<8x128xf32, #tpu.memory_space<vmem>>, vector<8x128xf32>
      tpu.vector_store %arg5[%c0_13, %c0_14], %16 {strides = array<i32>} : memref<8x128xf32, #tpu.memory_space<vmem>>, vector<8x128xf32>,
    } else {
    }
    return
  }
  func.func @transform_0(%arg0: i32, %arg1: i32, %arg2: i32) -> (i32, i32) {
    %c0_i32 = arith.constant 0 : i32
    return %arg0, %arg2 : i32, i32
  }
  func.func @transform_1(%arg0: i32, %arg1: i32, %arg2: i32) -> (i32, i32) {
    %c0_i32 = arith.constant 0 : i32
    return %arg2, %arg1 : i32, i32
  }
  func.func @transform_2(%arg0: i32, %arg1: i32, %arg2: i32) -> (i32, i32) {
    %c0_i32 = arith.constant 0 : i32
    return %arg0, %arg1 : i32, i32
  }
}

</mosaic_0001>

<llo_original>
// kernel: tpu_custom_call.1
$region0: #{tpu_custom_call.1}
  #allocation0 [shape = 'u32[]', space=smem, size = 0x4, offset = 0x4, fixed_abs, tag = 'smem constant byte address 0x4 - core index']
  #allocation1 [shape = 'u32[144,128]{1,0:T(1,128)}', space=vmem, size = 0x12000, scoped, tag = 'internal scratch']
  %s0 = inlined_call_operand.hbm [shape: f32[8,1024], index: 0, kind: input, shape index: {}]
  %s1 = inlined_call_operand.hbm [shape: f32[1024,128], index: 1, kind: input, shape index: {}]
  %s2 = inlined_call_operand.hbm [shape: f32[8,128], index: 2, kind: output, shape index: {}]
  %s3 = sld [smem:[#allocation0]]
  $region34: #{tpu_custom_call.1} parent=0
    _
  %s5 = ssub.s32 1, %s3
  %s6 = scalar_select 0, %s5, %s3
  $region1: #{tpu_custom_call.1} parent=0
    #allocation2 [shape = 'u8[32768]{0}', space=vmem, size = 0x8000, scoped, tag = 'input window, operand 0, single buffered']
    #allocation3 [shape = 's32[1]{0}', space=sflag, size = 0x4, scoped, tag = 'scoped memory for tpu_custom_call.1']
    #allocation4 [shape = 's32[1]{0}', space=sflag, size = 0x4, scoped, tag = 'scoped memory for tpu_custom_call.1']
    #allocation5 [shape = 'u8[524288]{0}', space=vmem, size = 0x80000, scoped, tag = 'input window, operand 1, single buffered']
    #allocation6 [shape = 's32[1]{0}', space=sflag, size = 0x4, scoped, tag = 'scoped memory for tpu_custom_call.1']
    #allocation7 [shape = 'u8[4096]{0}', space=vmem, size = 0x1000, scoped, tag = 'output window, operand 0, single buffered']
    %7 = vsyncpa [#allocation3], 0
    %8 = vsyncpa [#allocation6], 0
    %9 = vsyncpa [#allocation4], 0
    // Predicated region
    $region2: #{tpu_custom_call.1} parent=1 // pred_check
      _
    $region3: #{tpu_custom_call.1} parent=1 // pred_check_branch
      %11 = sbr.rel (0) target = $region5
    $region4: #{tpu_custom_call.1} parent=1 // pred_region
      %s13 = ssub.s32 1024, 1024
      %14 = vsyncadd [#allocation3], %s13
      %s16 = sshll.u32 [#allocation2], 4
      %s17 = int_to_ptr.vmem [resolvable:$true] %s16
      %19 = dma.hbm_to_vmem [thread:$0]  %s0, 1024, %s17, [#allocation3]
    $region5: #{tpu_custom_call.1} parent=1 // pred_fallthru
      _
    // Predicated region
    $region6: #{tpu_custom_call.1} parent=1 // pred_check
      _
    $region7: #{tpu_custom_call.1} parent=1 // pred_check_branch
      %21 = sbr.rel (0) target = $region9
    $region8: #{tpu_custom_call.1} parent=1 // pred_region
      %s23 = ssub.s32 16384, 16384
      %24 = vsyncadd [#allocation6], %s23
      %s25 = sshll.u32 [#allocation5], 4
      %s26 = int_to_ptr.vmem [resolvable:$true] %s25
      %31 = dma.hbm_to_vmem [thread:$0]  %s1, 16384, %s26, [#allocation6], 128, 128, 8
    $region9: #{tpu_custom_call.1} parent=1 // pred_fallthru
      _
    // Predicated region
    $region10: #{tpu_custom_call.1} parent=1 // pred_check
      _
    $region11: #{tpu_custom_call.1} parent=1 // pred_check_branch
      %33 = sbr.rel (0) target = $region13
    $region12: #{tpu_custom_call.1} parent=1 // pred_region
      %34 = dma.done [#allocation3], 1024
    $region13: #{tpu_custom_call.1} parent=1 // pred_fallthru
      _
    // Predicated region
    $region14: #{tpu_custom_call.1} parent=1 // pred_check
      _
    $region15: #{tpu_custom_call.1} parent=1 // pred_check_branch
      %36 = sbr.rel (0) target = $region17
    $region16: #{tpu_custom_call.1} parent=1 // pred_region
      %37 = dma.done [#allocation6], 16384
    $region17: #{tpu_custom_call.1} parent=1 // pred_fallthru
      _
    %p38 = scmp.eq.s32.totalorder 0, 0
    // Predicated region
    $region18: #{tpu_custom_call.1} parent=1 // pred_check
      %p39 = pneg %p38
    $region19: #{tpu_custom_call.1} parent=1 // pred_check_branch
      %41 = sbr.rel (%p39) target = $region21
    $region20: #{tpu_custom_call.1} parent=1 // pred_region
      %42 = vst [vmem:[#allocation7] sm:$0xff] 0.0
    $region21: #{tpu_custom_call.1} parent=1 // pred_fallthru
      _
    %v43 = vld [vmem:[#allocation7] sm:$0xff]
    %v44 = vld [vmem:[#allocation2] sm:$0xff]
    %v45 = vld [vmem:[#allocation2 + $0x8] sm:$0xff]
    %v46 = vld [vmem:[#allocation2 + $0x10] sm:$0xff]
    %v47 = vld [vmem:[#allocation2 + $0x18] sm:$0xff]
    %v48 = vld [vmem:[#allocation2 + $0x20] sm:$0xff]
    %v49 = vld [vmem:[#allocation2 + $0x28] sm:$0xff]
    %v50 = vld [vmem:[#allocation2 + $0x30] sm:$0xff]
    %v51 = vld [vmem:[#allocation2 + $0x38] sm:$0xff]
    %v52 = vld [vmem:[#allocation5] sm:$0xff]
    %v53 = vld [vmem:[#allocation5 + $0x8] sm:$0xff]
    %v54 = vld [vmem:[#allocation5 + $0x10] sm:$0xff]
    %v55 = vld [vmem:[#allocation5 + $0x18] sm:$0xff]
    %v56 = vld [vmem:[#allocation5 + $0x20] sm:$0xff]
    %v57 = vld [vmem:[#allocation5 + $0x28] sm:$0xff]
    %v58 = vld [vmem:[#allocation5 + $0x30] sm:$0xff]
    %v59 = vld [vmem:[#allocation5 + $0x38] sm:$0xff]
    %v60 = vld [vmem:[#allocation5 + $0x40] sm:$0xff]
    %v61 = vld [vmem:[#allocation5 + $0x48] sm:$0xff]
    %v62 = vld [vmem:[#allocation5 + $0x50] sm:$0xff]
    %v63 = vld [vmem:[#allocation5 + $0x58] sm:$0xff]
    %v64 = vld [vmem:[#allocation5 + $0x60] sm:$0xff]
    %v65 = vld [vmem:[#allocation5 + $0x68] sm:$0xff]
    %v66 = vld [vmem:[#allocation5 + $0x70] sm:$0xff]
    %v67 = vld [vmem:[#allocation5 + $0x78] sm:$0xff]
    %v68 = vld [vmem:[#allocation5 + $0x80] sm:$0xff]
    %v69 = vld [vmem:[#allocation5 + $0x88] sm:$0xff]
    %v70 = vld [vmem:[#allocation5 + $0x90] sm:$0xff]
    %v71 = vld [vmem:[#allocation5 + $0x98] sm:$0xff]
    %v72 = vld [vmem:[#allocation5 + $0xa0] sm:$0xff]
    %v73 = vld [vmem:[#allocation5 + $0xa8] sm:$0xff]
    %v74 = vld [vmem:[#allocation5 + $0xb0] sm:$0xff]
    %v75 = vld [vmem:[#allocation5 + $0xb8] sm:$0xff]
    %v76 = vld [vmem:[#allocation5 + $0xc0] sm:$0xff]
    %v77 = vld [vmem:[#allocation5 + $0xc8] sm:$0xff]
    %v78 = vld [vmem:[#allocation5 + $0xd0] sm:$0xff]
    %v79 = vld [vmem:[#allocation5 + $0xd8] sm:$0xff]
    %v80 = vld [vmem:[#allocation5 + $0xe0] sm:$0xff]
    %v81 = vld [vmem:[#allocation5 + $0xe8] sm:$0xff]
    %v82 = vld [vmem:[#allocation5 + $0xf0] sm:$0xff]
    %v83 = vld [vmem:[#allocation5 + $0xf8] sm:$0xff]
    %v84 = vld [vmem:[#allocation5 + $0x100] sm:$0xff]
    %v85 = vld [vmem:[#allocation5 + $0x108] sm:$0xff]
    %v86 = vld [vmem:[#allocation5 + $0x110] sm:$0xff]
    %v87 = vld [vmem:[#allocation5 + $0x118] sm:$0xff]
    %v88 = vld [vmem:[#allocation5 + $0x120] sm:$0xff]
    %v89 = vld [vmem:[#allocation5 + $0x128] sm:$0xff]
    %v90 = vld [vmem:[#allocation5 + $0x130] sm:$0xff]
    %v91 = vld [vmem:[#allocation5 + $0x138] sm:$0xff]
    %v92 = vld [vmem:[#allocation5 + $0x140] sm:$0xff]
    %v93 = vld [vmem:[#allocation5 + $0x148] sm:$0xff]
    %v94 = vld [vmem:[#allocation5 + $0x150] sm:$0xff]
    %v95 = vld [vmem:[#allocation5 + $0x158] sm:$0xff]
    %v96 = vld [vmem:[#allocation5 + $0x160] sm:$0xff]
    %v97 = vld [vmem:[#allocation5 + $0x168] sm:$0xff]
    %v98 = vld [vmem:[#allocation5 + $0x170] sm:$0xff]
    %v99 = vld [vmem:[#allocation5 + $0x178] sm:$0xff]
    %v100 = vld [vmem:[#allocation5 + $0x180] sm:$0xff]
    %v101 = vld [vmem:[#allocation5 + $0x188] sm:$0xff]
    %v102 = vld [vmem:[#allocation5 + $0x190] sm:$0xff]
    %v103 = vld [vmem:[#allocation5 + $0x198] sm:$0xff]
    %v104 = vld [vmem:[#allocation5 + $0x1a0] sm:$0xff]
    %v105 = vld [vmem:[#allocation5 + $0x1a8] sm:$0xff]
    %v106 = vld [vmem:[#allocation5 + $0x1b0] sm:$0xff]
    %v107 = vld [vmem:[#allocation5 + $0x1b8] sm:$0xff]
    %v108 = vld [vmem:[#allocation5 + $0x1c0] sm:$0xff]
    %v109 = vld [vmem:[#allocation5 + $0x1c8] sm:$0xff]
    %v110 = vld [vmem:[#allocation5 + $0x1d0] sm:$0xff]
    %v111 = vld [vmem:[#allocation5 + $0x1d8] sm:$0xff]
    %v112 = vld [vmem:[#allocation5 + $0x1e0] sm:$0xff]
    %v113 = vld [vmem:[#allocation5 + $0x1e8] sm:$0xff]
    %v114 = vld [vmem:[#allocation5 + $0x1f0] sm:$0xff]
    %v115 = vld [vmem:[#allocation5 + $0x1f8] sm:$0xff]
    %v116 = vld [vmem:[#allocation5 + $0x200] sm:$0xff]
    %v117 = vld [vmem:[#allocation5 + $0x208] sm:$0xff]
    %v118 = vld [vmem:[#allocation5 + $0x210] sm:$0xff]
    %v119 = vld [vmem:[#allocation5 + $0x218] sm:$0xff]
    %v120 = vld [vmem:[#allocation5 + $0x220] sm:$0xff]
    %v121 = vld [vmem:[#allocation5 + $0x228] sm:$0xff]
    %v122 = vld [vmem:[#allocation5 + $0x230] sm:$0xff]
    %v123 = vld [vmem:[#allocation5 + $0x238] sm:$0xff]
    %v124 = vld [vmem:[#allocation5 + $0x240] sm:$0xff]
    %v125 = vld [vmem:[#allocation5 + $0x248] sm:$0xff]
    %v126 = vld [vmem:[#allocation5 + $0x250] sm:$0xff]
    %v127 = vld [vmem:[#allocation5 + $0x258] sm:$0xff]
    %v128 = vld [vmem:[#allocation5 + $0x260] sm:$0xff]
    %v129 = vld [vmem:[#allocation5 + $0x268] sm:$0xff]
    %v130 = vld [vmem:[#allocation5 + $0x270] sm:$0xff]
    %v131 = vld [vmem:[#allocation5 + $0x278] sm:$0xff]
    %v132 = vld [vmem:[#allocation5 + $0x280] sm:$0xff]
    %v133 = vld [vmem:[#allocation5 + $0x288] sm:$0xff]
    %v134 = vld [vmem:[#allocation5 + $0x290] sm:$0xff]
    %v135 = vld [vmem:[#allocation5 + $0x298] sm:$0xff]
    %v136 = vld [vmem:[#allocation5 + $0x2a0] sm:$0xff]
    %v137 = vld [vmem:[#allocation5 + $0x2a8] sm:$0xff]
    %v138 = vld [vmem:[#allocation5 + $0x2b0] sm:$0xff]
    %v139 = vld [vmem:[#allocation5 + $0x2b8] sm:$0xff]
    %v140 = vld [vmem:[#allocation5 + $0x2c0] sm:$0xff]
    %v141 = vld [vmem:[#allocation5 + $0x2c8] sm:$0xff]
    %v142 = vld [vmem:[#allocation5 + $0x2d0] sm:$0xff]
    %v143 = vld [vmem:[#allocation5 + $0x2d8] sm:$0xff]
    %v144 = vld [vmem:[#allocation5 + $0x2e0] sm:$0xff]
    %v145 = vld [vmem:[#allocation5 + $0x2e8] sm:$0xff]
    %v146 = vld [vmem:[#allocation5 + $0x2f0] sm:$0xff]
    %v147 = vld [vmem:[#allocation5 + $0x2f8] sm:$0xff]
    %v148 = vld [vmem:[#allocation5 + $0x300] sm:$0xff]
    %v149 = vld [vmem:[#allocation5 + $0x308] sm:$0xff]
    %v150 = vld [vmem:[#allocation5 + $0x310] sm:$0xff]
    %v151 = vld [vmem:[#allocation5 + $0x318] sm:$0xff]
    %v152 = vld [vmem:[#allocation5 + $0x320] sm:$0xff]
    %v153 = vld [vmem:[#allocation5 + $0x328] sm:$0xff]
    %v154 = vld [vmem:[#allocation5 + $0x330] sm:$0xff]
    %v155 = vld [vmem:[#allocation5 + $0x338] sm:$0xff]
    %v156 = vld [vmem:[#allocation5 + $0x340] sm:$0xff]
    %v157 = vld [vmem:[#allocation5 + $0x348] sm:$0xff]
    %v158 = vld [vmem:[#allocation5 + $0x350] sm:$0xff]
    %v159 = vld [vmem:[#allocation5 + $0x358] sm:$0xff]
    %v160 = vld [vmem:[#allocation5 + $0x360] sm:$0xff]
    %v161 = vld [vmem:[#allocation5 + $0x368] sm:$0xff]
    %v162 = vld [vmem:[#allocation5 + $0x370] sm:$0xff]
    %v163 = vld [vmem:[#allocation5 + $0x378] sm:$0xff]
    %v164 = vld [vmem:[#allocation5 + $0x380] sm:$0xff]
    %v165 = vld [vmem:[#allocation5 + $0x388] sm:$0xff]
    %v166 = vld [vmem:[#allocation5 + $0x390] sm:$0xff]
    %v167 = vld [vmem:[#allocation5 + $0x398] sm:$0xff]
    %v168 = vld [vmem:[#allocation5 + $0x3a0] sm:$0xff]
    %v169 = vld [vmem:[#allocation5 + $0x3a8] sm:$0xff]
    %v170 = vld [vmem:[#allocation5 + $0x3b0] sm:$0xff]
    %v171 = vld [vmem:[#allocation5 + $0x3b8] sm:$0xff]
    %v172 = vld [vmem:[#allocation5 + $0x3c0] sm:$0xff]
    %v173 = vld [vmem:[#allocation5 + $0x3c8] sm:$0xff]
    %v174 = vld [vmem:[#allocation5 + $0x3d0] sm:$0xff]
    %v175 = vld [vmem:[#allocation5 + $0x3d8] sm:$0xff]
    %v176 = vld [vmem:[#allocation5 + $0x3e0] sm:$0xff]
    %v177 = vld [vmem:[#allocation5 + $0x3e8] sm:$0xff]
    %v178 = vld [vmem:[#allocation5 + $0x3f0] sm:$0xff]
    %v179 = vld [vmem:[#allocation5 + $0x3f8] sm:$0xff]
    %180 = vmatprep.subr.mxu0 0.0
    %181 = vmatpush1.msra.mxu0 %v52
    %182 = vmatprep.subr.mxu0 0.0
    %183 = vmatpush1.msra.mxu0 %v53
    %184 = vmatprep.subr.mxu0 0.0
    %185 = vmatpush1.msra.mxu0 %v54
    %186 = vmatprep.subr.mxu0 0.0
    %187 = vmatpush1.msra.mxu0 %v55
    %188 = vmatprep.subr.mxu0 0.0
    %189 = vmatpush1.msra.mxu0 %v56
    %190 = vmatprep.subr.mxu0 0.0
    %191 = vmatpush1.msra.mxu0 %v57
    %192 = vmatprep.subr.mxu0 0.0
    %193 = vmatpush1.msra.mxu0 %v58
    %194 = vmatprep.subr.mxu0 0.0
    %195 = vmatpush1.msra.mxu0 %v59
    %196 = vmatprep.subr.mxu0 0.0
    %197 = vmatpush1.msra.mxu0 %v60
    %198 = vmatprep.subr.mxu0 0.0
    %199 = vmatpush1.msra.mxu0 %v61
    %200 = vmatprep.subr.mxu0 0.0
    %201 = vmatpush1.msra.mxu0 %v62
    %202 = vmatprep.subr.mxu0 0.0
    %203 = vmatpush1.msra.mxu0 %v63
    %204 = vmatprep.subr.mxu0 0.0
    %205 = vmatpush1.msra.mxu0 %v64
    %206 = vmatprep.subr.mxu0 0.0
    %207 = vmatpush1.msra.mxu0 %v65
    %208 = vmatprep.subr.mxu0 0.0
    %209 = vmatpush1.msra.mxu0 %v66
    %210 = vmatprep.subr.mxu0 0.0
    %211 = vmatpush1.msra.mxu0 %v67
    %212 = vmatprep.subr.mxu0 0.0
    %213 = vmatpush1.msra.mxu0 %v68
    %214 = vmatprep.subr.mxu0 0.0
    %215 = vmatpush1.msra.mxu0 %v69
    %216 = vmatprep.subr.mxu0 0.0
    %217 = vmatpush1.msra.mxu0 %v70
    %218 = vmatprep.subr.mxu0 0.0
    %219 = vmatpush1.msra.mxu0 %v71
    %220 = vmatprep.subr.mxu0 0.0
    %221 = vmatpush1.msra.mxu0 %v72
    %222 = vmatprep.subr.mxu0 0.0
    %223 = vmatpush1.msra.mxu0 %v73
    %224 = vmatprep.subr.mxu0 0.0
    %225 = vmatpush1.msra.mxu0 %v74
    %226 = vmatprep.subr.mxu0 0.0
    %227 = vmatpush1.msra.mxu0 %v75
    %228 = vmatprep.subr.mxu0 0.0
    %229 = vmatpush1.msra.mxu0 %v76
    %230 = vmatprep.subr.mxu0 0.0
    %231 = vmatpush1.msra.mxu0 %v77
    %232 = vmatprep.subr.mxu0 0.0
    %233 = vmatpush1.msra.mxu0 %v78
    %234 = vmatprep.subr.mxu0 0.0
    %235 = vmatpush1.msra.mxu0 %v79
    %236 = vmatprep.subr.mxu0 0.0
    %237 = vmatpush1.msra.mxu0 %v80
    %238 = vmatprep.subr.mxu0 0.0
    %239 = vmatpush1.msra.mxu0 %v81
    %240 = vmatprep.subr.mxu0 0.0
    %241 = vmatpush1.msra.mxu0 %v82
    %242 = vmatprep.subr.mxu0 0.0
    %243 = vmatpush1.msra.mxu0 %v83
    %244 = vmatprep.mubr.f32.mxu0 %v45
    %245 = vmatmul.mubr.f32.gmra.mrb[0].mxu0 %v44
    %v246 = vpop.f32.mrb[0].mxu0
    %v247 = vadd.f32 0.0, %v246
    %v248 = vpop.f32.mrb[0].mxu0
    %249 = vdwg.mxu0
    %250 = vmatprep.subr.mxu0 0.0
    %251 = vmatpush1.msra.mxu0 %v84
    %252 = vmatprep.subr.mxu0 0.0
    %253 = vmatpush1.msra.mxu0 %v85
    %254 = vmatprep.subr.mxu0 0.0
    %255 = vmatpush1.msra.mxu0 %v86
    %256 = vmatprep.subr.mxu0 0.0
    %257 = vmatpush1.msra.mxu0 %v87
    %258 = vmatprep.subr.mxu0 0.0
    %259 = vmatpush1.msra.mxu0 %v88
    %260 = vmatprep.subr.mxu0 0.0
    %261 = vmatpush1.msra.mxu0 %v89
    %262 = vmatprep.subr.mxu0 0.0
    %263 = vmatpush1.msra.mxu0 %v90
    %264 = vmatprep.subr.mxu0 0.0
    %265 = vmatpush1.msra.mxu0 %v91
    %266 = vmatprep.subr.mxu0 0.0
    %267 = vmatpush1.msra.mxu0 %v92
    %268 = vmatprep.subr.mxu0 0.0
    %269 = vmatpush1.msra.mxu0 %v93
    %270 = vmatprep.subr.mxu0 0.0
    %271 = vmatpush1.msra.mxu0 %v94
    %272 = vmatprep.subr.mxu0 0.0
    %273 = vmatpush1.msra.mxu0 %v95
    %274 = vmatprep.subr.mxu0 0.0
    %275 = vmatpush1.msra.mxu0 %v96
    %276 = vmatprep.subr.mxu0 0.0
    %277 = vmatpush1.msra.mxu0 %v97
    %278 = vmatprep.subr.mxu0 0.0
    %279 = vmatpush1.msra.mxu0 %v98
    %280 = vmatprep.subr.mxu0 0.0
    %281 = vmatpush1.msra.mxu0 %v99
    %282 = vmatprep.subr.mxu0 0.0
    %283 = vmatpush1.msra.mxu0 %v100
    %284 = vmatprep.subr.mxu0 0.0
    %285 = vmatpush1.msra.mxu0 %v101
    %286 = vmatprep.subr.mxu0 0.0
    %287 = vmatpush1.msra.mxu0 %v102
    %288 = vmatprep.subr.mxu0 0.0
    %289 = vmatpush1.msra.mxu0 %v103
    %290 = vmatprep.subr.mxu0 0.0
    %291 = vmatpush1.msra.mxu0 %v104
    %292 = vmatprep.subr.mxu0 0.0
    %293 = vmatpush1.msra.mxu0 %v105
    %294 = vmatprep.subr.mxu0 0.0
    %295 = vmatpush1.msra.mxu0 %v106
    %296 = vmatprep.subr.mxu0 0.0
    %297 = vmatpush1.msra.mxu0 %v107
    %298 = vmatprep.subr.mxu0 0.0
    %299 = vmatpush1.msra.mxu0 %v108
    %300 = vmatprep.subr.mxu0 0.0
    %301 = vmatpush1.msra.mxu0 %v109
    %302 = vmatprep.subr.mxu0 0.0
    %303 = vmatpush1.msra.mxu0 %v110
    %304 = vmatprep.subr.mxu0 0.0
    %305 = vmatpush1.msra.mxu0 %v111
    %306 = vmatprep.subr.mxu0 0.0
    %307 = vmatpush1.msra.mxu0 %v112
    %308 = vmatprep.subr.mxu0 0.0
    %309 = vmatpush1.msra.mxu0 %v113
    %310 = vmatprep.subr.mxu0 0.0
    %311 = vmatpush1.msra.mxu0 %v114
    %312 = vmatprep.subr.mxu0 0.0
    %313 = vmatpush1.msra.mxu0 %v115
    %314 = vmatprep.mubr.f32.mxu0 %v47
    %315 = vmatmul.mubr.f32.gmra.mrb[0].mxu0 %v46
    %v316 = vpop.f32.mrb[0].mxu0
    %v317 = vadd.f32 %v247, %v316
    %v318 = vpop.f32.mrb[0].mxu0
    %319 = vdwg.mxu0
    %320 = vmatprep.subr.mxu0 0.0
    %321 = vmatpush1.msra.mxu0 %v116
    %322 = vmatprep.subr.mxu0 0.0
    %323 = vmatpush1.msra.mxu0 %v117
    %324 = vmatprep.subr.mxu0 0.0
    %325 = vmatpush1.msra.mxu0 %v118
    %326 = vmatprep.subr.mxu0 0.0
    %327 = vmatpush1.msra.mxu0 %v119
    %328 = vmatprep.subr.mxu0 0.0
    %329 = vmatpush1.msra.mxu0 %v120
    %330 = vmatprep.subr.mxu0 0.0
    %331 = vmatpush1.msra.mxu0 %v121
    %332 = vmatprep.subr.mxu0 0.0
    %333 = vmatpush1.msra.mxu0 %v122
    %334 = vmatprep.subr.mxu0 0.0
    %335 = vmatpush1.msra.mxu0 %v123
    %336 = vmatprep.subr.mxu0 0.0
    %337 = vmatpush1.msra.mxu0 %v124
    %338 = vmatprep.subr.mxu0 0.0
    %339 = vmatpush1.msra.mxu0 %v125
    %340 = vmatprep.subr.mxu0 0.0
    %341 = vmatpush1.msra.mxu0 %v126
    %342 = vmatprep.subr.mxu0 0.0
    %343 = vmatpush1.msra.mxu0 %v127
    %344 = vmatprep.subr.mxu0 0.0
    %345 = vmatpush1.msra.mxu0 %v128
    %346 = vmatprep.subr.mxu0 0.0
    %347 = vmatpush1.msra.mxu0 %v129
    %348 = vmatprep.subr.mxu0 0.0
    %349 = vmatpush1.msra.mxu0 %v130
    %350 = vmatprep.subr.mxu0 0.0
    %351 = vmatpush1.msra.mxu0 %v131
    %352 = vmatprep.subr.mxu0 0.0
    %353 = vmatpush1.msra.mxu0 %v132
    %354 = vmatprep.subr.mxu0 0.0
    %355 = vmatpush1.msra.mxu0 %v133
    %356 = vmatprep.subr.mxu0 0.0
    %357 = vmatpush1.msra.mxu0 %v134
    %358 = vmatprep.subr.mxu0 0.0
    %359 = vmatpush1.msra.mxu0 %v135
    %360 = vmatprep.subr.mxu0 0.0
    %361 = vmatpush1.msra.mxu0 %v136
    %362 = vmatprep.subr.mxu0 0.0
    %363 = vmatpush1.msra.mxu0 %v137
    %364 = vmatprep.subr.mxu0 0.0
    %365 = vmatpush1.msra.mxu0 %v138
    %366 = vmatprep.subr.mxu0 0.0
    %367 = vmatpush1.msra.mxu0 %v139
    %368 = vmatprep.subr.mxu0 0.0
    %369 = vmatpush1.msra.mxu0 %v140
    %370 = vmatprep.subr.mxu0 0.0
    %371 = vmatpush1.msra.mxu0 %v141
    %372 = vmatprep.subr.mxu0 0.0
    %373 = vmatpush1.msra.mxu0 %v142
    %374 = vmatprep.subr.mxu0 0.0
    %375 = vmatpush1.msra.mxu0 %v143
    %376 = vmatprep.subr.mxu0 0.0
    %377 = vmatpush1.msra.mxu0 %v144
    %378 = vmatprep.subr.mxu0 0.0
    %379 = vmatpush1.msra.mxu0 %v145
    %380 = vmatprep.subr.mxu0 0.0
    %381 = vmatpush1.msra.mxu0 %v146
    %382 = vmatprep.subr.mxu0 0.0
    %383 = vmatpush1.msra.mxu0 %v147
    %384 = vmatprep.mubr.f32.mxu0 %v49
    %385 = vmatmul.mubr.f32.gmra.mrb[0].mxu0 %v48
    %v386 = vpop.f32.mrb[0].mxu0
    %v387 = vadd.f32 %v317, %v386
    %v388 = vpop.f32.mrb[0].mxu0
    %389 = vdwg.mxu0
    %390 = vmatprep.subr.mxu0 0.0
    %391 = vmatpush1.msra.mxu0 %v148
    %392 = vmatprep.subr.mxu0 0.0
    %393 = vmatpush1.msra.mxu0 %v149
    %394 = vmatprep.subr.mxu0 0.0
    %395 = vmatpush1.msra.mxu0 %v150
    %396 = vmatprep.subr.mxu0 0.0
    %397 = vmatpush1.msra.mxu0 %v151
    %398 = vmatprep.subr.mxu0 0.0
    %399 = vmatpush1.msra.mxu0 %v152
    %400 = vmatprep.subr.mxu0 0.0
    %401 = vmatpush1.msra.mxu0 %v153
    %402 = vmatprep.subr.mxu0 0.0
    %403 = vmatpush1.msra.mxu0 %v154
    %404 = vmatprep.subr.mxu0 0.0
    %405 = vmatpush1.msra.mxu0 %v155
    %406 = vmatprep.subr.mxu0 0.0
    %407 = vmatpush1.msra.mxu0 %v156
    %408 = vmatprep.subr.mxu0 0.0
    %409 = vmatpush1.msra.mxu0 %v157
    %410 = vmatprep.subr.mxu0 0.0
    %411 = vmatpush1.msra.mxu0 %v158
    %412 = vmatprep.subr.mxu0 0.0
    %413 = vmatpush1.msra.mxu0 %v159
    %414 = vmatprep.subr.mxu0 0.0
    %415 = vmatpush1.msra.mxu0 %v160
    %416 = vmatprep.subr.mxu0 0.0
    %417 = vmatpush1.msra.mxu0 %v161
    %418 = vmatprep.subr.mxu0 0.0
    %419 = vmatpush1.msra.mxu0 %v162
    %420 = vmatprep.subr.mxu0 0.0
    %421 = vmatpush1.msra.mxu0 %v163
    %422 = vmatprep.subr.mxu0 0.0
    %423 = vmatpush1.msra.mxu0 %v164
    %424 = vmatprep.subr.mxu0 0.0
    %425 = vmatpush1.msra.mxu0 %v165
    %426 = vmatprep.subr.mxu0 0.0
    %427 = vmatpush1.msra.mxu0 %v166
    %428 = vmatprep.subr.mxu0 0.0
    %429 = vmatpush1.msra.mxu0 %v167
    %430 = vmatprep.subr.mxu0 0.0
    %431 = vmatpush1.msra.mxu0 %v168
    %432 = vmatprep.subr.mxu0 0.0
    %433 = vmatpush1.msra.mxu0 %v169
    %434 = vmatprep.subr.mxu0 0.0
    %435 = vmatpush1.msra.mxu0 %v170
    %436 = vmatprep.subr.mxu0 0.0
    %437 = vmatpush1.msra.mxu0 %v171
    %438 = vmatprep.subr.mxu0 0.0
    %439 = vmatpush1.msra.mxu0 %v172
    %440 = vmatprep.subr.mxu0 0.0
    %441 = vmatpush1.msra.mxu0 %v173
    %442 = vmatprep.subr.mxu0 0.0
    %443 = vmatpush1.msra.mxu0 %v174
    %444 = vmatprep.subr.mxu0 0.0
    %445 = vmatpush1.msra.mxu0 %v175
    %446 = vmatprep.subr.mxu0 0.0
    %447 = vmatpush1.msra.mxu0 %v176
    %448 = vmatprep.subr.mxu0 0.0
    %449 = vmatpush1.msra.mxu0 %v177
    %450 = vmatprep.subr.mxu0 0.0
    %451 = vmatpush1.msra.mxu0 %v178
    %452 = vmatprep.subr.mxu0 0.0
    %453 = vmatpush1.msra.mxu0 %v179
    %454 = vmatprep.mubr.f32.mxu0 %v51
    %455 = vmatmul.mubr.f32.gmra.mrb[0].mxu0 %v50
    %v456 = vpop.f32.mrb[0].mxu0
    %v457 = vadd.f32 %v387, %v456
    %v458 = vpop.f32.mrb[0].mxu0
    %459 = vdwg.mxu0
    %v460 = vadd.f32 %v43, %v457
    %461 = vst [vmem:[#allocation7] sm:$0xff] %v460
    // Predicated region
    $region22: #{tpu_custom_call.1} parent=1 // pred_check
      %p462 = pneg %p38
    $region23: #{tpu_custom_call.1} parent=1 // pred_check_branch
      %464 = sbr.rel (%p462) target = $region25
    $region24: #{tpu_custom_call.1} parent=1 // pred_region
      %v465 = vld [vmem:[#allocation7] sm:$0xff]
      %vm466 = vcmp.ge.f32.partialorder %v465, 2.0
      %v467 = vsel %vm466, 1, 0
      %v468 = vcvt.s32.f32 %v467
      %469 = vst [vmem:[#allocation7] sm:$0xff] %v468
    $region25: #{tpu_custom_call.1} parent=1 // pred_fallthru
      _
    // Predicated region
    $region26: #{tpu_custom_call.1} parent=1 // pred_check
      _
    $region27: #{tpu_custom_call.1} parent=1 // pred_check_branch
      %471 = sbr.rel (0) target = $region29
    $region28: #{tpu_custom_call.1} parent=1 // pred_region
      %s473 = ssub.s32 128, 128
      %474 = vsyncadd [#allocation4], %s473
      %s476 = sshll.u32 [#allocation7], 4
      %s477 = int_to_ptr.vmem [resolvable:$true] %s476
      %479 = dma.vmem_to_hbm [thread:$0]  %s477, 128, %s2, [#allocation4]
    $region29: #{tpu_custom_call.1} parent=1 // pred_fallthru
      _
    // Predicated region
    $region30: #{tpu_custom_call.1} parent=1 // pred_check
      _
    $region31: #{tpu_custom_call.1} parent=1 // pred_check_branch
      %481 = sbr.rel (0) target = $region33
    $region32: #{tpu_custom_call.1} parent=1 // pred_region
      %482 = dma.done [#allocation4], 128
    $region33: #{tpu_custom_call.1} parent=1 // pred_fallthru
      _
    %483 = vsyncpa [#allocation3], 1
    %484 = vsyncpa [#allocation6], 1
    %485 = vsyncpa [#allocation4], 1

</llo_original>
